<compile_context>
chip_gen: v7x
topology: tpu7x:2x2x1
jax: 0.10.0
libtpu: 0.0.40
codegen_flags: <defaults>
</compile_context>

<pallas_src>
import functools

import jax
import jax.numpy as jnp
from jax.experimental import pallas as pl
from jax.experimental.pallas import tpu as pltpu

_LANE = 128  # TPU lane width; final output padded to a multiple of this.


def _make_fused_decoder_kernel(num_layers):
    """Builds a kernel: o = relu(...relu(relu(x@W0+b0)@W1+b1)...@W_{L-1}+b_{L-1})."""

    def kernel(x_ref, *refs):
        # refs = (w0, b0, w1, b1, ..., w_{L-1}, b_{L-1}, o_ref)
        o_ref = refs[-1]
        h = x_ref[...]
        for i in range(num_layers):
            w = refs[2 * i][...]       # (in_i, out_i)  -- pre-transposed
            b = refs[2 * i + 1][...]   # (1, out_i)
            h = jnp.dot(h, w, preferred_element_type=jnp.float32)
            h = jnp.maximum(h + b, 0.0)  # f32 epilogue (safe on v5e VPU too)
        o_ref[...] = h.astype(o_ref.dtype)

    return kernel


def init_rq_decoder_params(key, latent_dim, hidden_channels, output_dim):
    """Deterministic init mirroring torch.nn.Linear: W (out, in), b (out,)."""
    dims = [latent_dim] + list(hidden_channels) + [output_dim]
    params = []
    for i in range(len(dims) - 1):
        in_dim, out_dim = dims[i], dims[i + 1]
        key, kw, kb = jax.random.split(key, 3)
        bound = 1.0 / (in_dim ** 0.5)
        w = jax.random.uniform(kw, (out_dim, in_dim), jnp.float32, -bound, bound)
        b = jax.random.uniform(kb, (out_dim,), jnp.float32, -bound, bound)
        params.append((w, b))
    return params


def pack_params(params, lane=_LANE):
    """One-time layout prep (outside jit): transpose W to (in, out), reshape b to
    (1, out), and zero-pad the FINAL layer's out-dim to a lane multiple so the
    kernel's only HBM store is lane-dense. ReLU(0 + 0) = 0, so padded columns
    stay zero and are sliced off in the wrapper."""
    packed = []
    last = len(params) - 1
    for i, (w, b) in enumerate(params):
        w_t = jnp.asarray(w).T                      # (in, out)
        b2 = jnp.asarray(b).reshape(1, -1)          # (1, out)
        if i == last:
            out_dim = w_t.shape[1]
            n_pad = (-out_dim) % lane
            if n_pad:
                w_t = jnp.pad(w_t, ((0, 0), (0, n_pad)))
                b2 = jnp.pad(b2, ((0, 0), (0, n_pad)))
        packed.append((w_t, b2))
    return packed


@functools.partial(jax.jit, static_argnames=("output_dim",))
def rq_decoder_forward(x, packed_params, output_dim):
    """Fused forward: one Pallas kernel for the whole Linear+ReLU stack."""
    num_layers = len(packed_params)
    flat = []
    for w_t, b in packed_params:
        flat.extend([w_t, b])

    M = x.shape[0]
    N_pad = packed_params[-1][0].shape[1]  # lane-padded final width

    # Advisory cost estimate so XLA schedules sensibly around the tiny call.
    flops = 0
    bytes_accessed = x.size * x.dtype.itemsize + M * N_pad * x.dtype.itemsize
    for w_t, b in packed_params:
        flops += 2 * M * w_t.shape[0] * w_t.shape[1]
        bytes_accessed += w_t.size * w_t.dtype.itemsize + b.size * b.dtype.itemsize

    y_pad = pl.pallas_call(
        _make_fused_decoder_kernel(num_layers),
        out_shape=jax.ShapeDtypeStruct((M, N_pad), x.dtype),
        in_specs=[pl.BlockSpec(memory_space=pltpu.MemorySpace.VMEM)]
        * (1 + 2 * num_layers),
        out_specs=pl.BlockSpec(memory_space=pltpu.MemorySpace.VMEM),
        cost_estimate=pl.CostEstimate(
            flops=flops, transcendentals=0, bytes_accessed=bytes_accessed
        ),
    )(x, *flat)

    return y_pad[:, :output_dim]


def rq_decoder_reference(x, params):
    for w, b in params:
        x = jnp.maximum(x @ w.T + b, 0.0)
    return x


if __name__ == "__main__":
    latent_dim = 32
    hidden_channels = [64, 48]
    output_dim = 16
    batch = 8

    key = jax.random.PRNGKey(0)
    key, kx = jax.random.split(key)
    x = jax.random.normal(kx, (batch, latent_dim), jnp.float32)

    params = init_rq_decoder_params(key, latent_dim, hidden_channels, output_dim)
    packed = pack_params(params)  # one-time transpose + lane padding (outside jit)

    out = rq_decoder_forward(x, packed, output_dim)
    out = jax.block_until_ready(out)

    ref = rq_decoder_reference(x, params)
    assert out.shape == (batch, output_dim), out.shape
    assert jnp.allclose(out, ref, atol=1e-5, rtol=1e-5), "mismatch vs reference"

    print("KERNEL_OK")
</pallas_src>

<mosaic_0001>
module attributes {stable_mosaic.version = 11 : i64} {
  func.func @kernel(%arg0: memref<8x32xf32, #tpu.memory_space<vmem>>, %arg1: memref<32x64xf32, #tpu.memory_space<vmem>>, %arg2: memref<1x64xf32, #tpu.memory_space<vmem>>, %arg3: memref<64x48xf32, #tpu.memory_space<vmem>>, %arg4: memref<1x48xf32, #tpu.memory_space<vmem>>, %arg5: memref<48x128xf32, #tpu.memory_space<vmem>>, %arg6: memref<1x128xf32, #tpu.memory_space<vmem>>, %arg7: memref<8x128xf32, #tpu.memory_space<vmem>>) attributes {dimension_semantics = [], scalar_prefetch = 0 : i64, scratch_operands = 0 : i64, tpu.core_type = #tpu.core_type<tc>} {
    %c0 = arith.constant 0 : index
    %c0_0 = arith.constant 0 : index
    %0 = vector.load %arg0[%c0, %c0_0] : memref<8x32xf32, #tpu.memory_space<vmem>>, vector<8x32xf32>
    %c0_1 = arith.constant 0 : index
    %c0_2 = arith.constant 0 : index
    %1 = vector.load %arg1[%c0_1, %c0_2] : memref<32x64xf32, #tpu.memory_space<vmem>>, vector<32x64xf32>
    %c0_3 = arith.constant 0 : index
    %c0_4 = arith.constant 0 : index
    %2 = vector.load %arg2[%c0_3, %c0_4] : memref<1x64xf32, #tpu.memory_space<vmem>>, vector<1x64xf32>
    %cst = arith.constant dense<0.000000e+00> : vector<8x64xf32>
    %3 = tpu.matmul %0, %1, %cst {dimension_numbers = #tpu.dot_dimension_numbers<[1], [0], [0], [1], [0, 0, 1, 1], [], []>} : vector<8x32xf32>, vector<32x64xf32>, vector<8x64xf32> -> vector<8x64xf32>
    %4 = vector.broadcast %2 : vector<1x64xf32> to vector<8x64xf32>
    %5 = arith.addf %3, %4 : vector<8x64xf32>
    %cst_5 = arith.constant 0.000000e+00 : f32
    %6 = vector.broadcast %cst_5 : f32 to vector<8x64xf32>
    %7 = arith.maximumf %5, %6 : vector<8x64xf32>
    %c0_6 = arith.constant 0 : index
    %c0_7 = arith.constant 0 : index
    %8 = vector.load %arg3[%c0_6, %c0_7] : memref<64x48xf32, #tpu.memory_space<vmem>>, vector<64x48xf32>
    %c0_8 = arith.constant 0 : index
    %c0_9 = arith.constant 0 : index
    %9 = vector.load %arg4[%c0_8, %c0_9] : memref<1x48xf32, #tpu.memory_space<vmem>>, vector<1x48xf32>
    %cst_10 = arith.constant dense<0.000000e+00> : vector<8x48xf32>
    %10 = tpu.matmul %7, %8, %cst_10 {dimension_numbers = #tpu.dot_dimension_numbers<[1], [0], [0], [1], [0, 0, 1, 1], [], []>} : vector<8x64xf32>, vector<64x48xf32>, vector<8x48xf32> -> vector<8x48xf32>
    %11 = vector.broadcast %9 : vector<1x48xf32> to vector<8x48xf32>
    %12 = arith.addf %10, %11 : vector<8x48xf32>
    %cst_11 = arith.constant 0.000000e+00 : f32
    %13 = vector.broadcast %cst_11 : f32 to vector<8x48xf32>
    %14 = arith.maximumf %12, %13 : vector<8x48xf32>
    %c0_12 = arith.constant 0 : index
    %c0_13 = arith.constant 0 : index
    %15 = vector.load %arg5[%c0_12, %c0_13] : memref<48x128xf32, #tpu.memory_space<vmem>>, vector<48x128xf32>
    %c0_14 = arith.constant 0 : index
    %c0_15 = arith.constant 0 : index
    %16 = vector.load %arg6[%c0_14, %c0_15] : memref<1x128xf32, #tpu.memory_space<vmem>>, vector<1x128xf32>
    %cst_16 = arith.constant dense<0.000000e+00> : vector<8x128xf32>
    %17 = tpu.matmul %14, %15, %cst_16 {dimension_numbers = #tpu.dot_dimension_numbers<[1], [0], [0], [1], [0, 0, 1, 1], [], []>} : vector<8x48xf32>, vector<48x128xf32>, vector<8x128xf32> -> vector<8x128xf32>
    %18 = vector.broadcast %16 : vector<1x128xf32> to vector<8x128xf32>
    %19 = arith.addf %17, %18 : vector<8x128xf32>
    %cst_17 = arith.constant 0.000000e+00 : f32
    %20 = vector.broadcast %cst_17 : f32 to vector<8x128xf32>
    %21 = arith.maximumf %19, %20 : vector<8x128xf32>
    %c0_18 = arith.constant 0 : index
    %c0_19 = arith.constant 0 : index
    %22 = vector.load %arg7[%c0_18, %c0_19] : memref<8x128xf32, #tpu.memory_space<vmem>>, vector<8x128xf32>
    tpu.vector_store %arg7[%c0_18, %c0_19], %21 {strides = array<i32>} : memref<8x128xf32, #tpu.memory_space<vmem>>, vector<8x128xf32>,
    return
  }
}

</mosaic_0001>

<llo_original>
// kernel: rq_decoder_forward.1
$region0: #{rq_decoder_forward.1}
  #allocation0 [shape = 'u32[]', space=smem, size = 0x4, offset = 0x4, fixed_abs, tag = 'smem constant byte address 0x4 - core index']
  #allocation1 [shape = 'u32[144,128]{1,0:T(1,128)}', space=vmem, size = 0x12000, scoped, tag = 'internal scratch']
  %s0 = inlined_call_operand.vmem [shape: f32[8,32], index: 0, kind: input, shape index: {}]
  %s1 = inlined_call_operand.vmem [shape: f32[32,64], index: 1, kind: input, shape index: {}]
  %s2 = inlined_call_operand.vmem [shape: f32[1,64], index: 2, kind: input, shape index: {}]
  %s3 = inlined_call_operand.vmem [shape: f32[64,48], index: 3, kind: input, shape index: {}]
  %s4 = inlined_call_operand.vmem [shape: f32[1,48], index: 4, kind: input, shape index: {}]
  %s5 = inlined_call_operand.vmem [shape: f32[48,128], index: 5, kind: input, shape index: {}]
  %s6 = inlined_call_operand.vmem [shape: f32[1,128], index: 6, kind: input, shape index: {}]
  %s7 = inlined_call_operand.hbm [shape: f32[8,128], index: 7, kind: output, shape index: {}]
  %s8 = sld [smem:[#allocation0]]
  $region38: #{rq_decoder_forward.1} parent=0
    _
  %s10 = ssub.s32 1, %s8
  %s11 = scalar_select 0, %s10, %s8
  $region1: #{rq_decoder_forward.1} parent=0
    #allocation2 [shape = 'u8[4096]{0}', space=vmem, size = 0x1000, scoped, tag = 'output window, operand 0, single buffered']
    #allocation3 [shape = 's32[1]{0}', space=sflag, size = 0x4, scoped, tag = 'scoped memory for rq_decoder_forward.1']
    %12 = vsyncpa [#allocation3], 0
    // Predicated region
    $region2: #{rq_decoder_forward.1} parent=1 // pred_check
      _
    $region3: #{rq_decoder_forward.1} parent=1 // pred_check_branch
      %14 = sbr.rel (0) target = $region5
    $region4: #{rq_decoder_forward.1} parent=1 // pred_region
      _
    $region5: #{rq_decoder_forward.1} parent=1 // pred_fallthru
      _
    // Predicated region
    $region6: #{rq_decoder_forward.1} parent=1 // pred_check
      _
    $region7: #{rq_decoder_forward.1} parent=1 // pred_check_branch
      %16 = sbr.rel (0) target = $region9
    $region8: #{rq_decoder_forward.1} parent=1 // pred_region
      _
    $region9: #{rq_decoder_forward.1} parent=1 // pred_fallthru
      _
    // Predicated region
    $region10: #{rq_decoder_forward.1} parent=1 // pred_check
      _
    $region11: #{rq_decoder_forward.1} parent=1 // pred_check_branch
      %18 = sbr.rel (0) target = $region13
    $region12: #{rq_decoder_forward.1} parent=1 // pred_region
      _
    $region13: #{rq_decoder_forward.1} parent=1 // pred_fallthru
      _
    // Predicated region
    $region14: #{rq_decoder_forward.1} parent=1 // pred_check
      _
    $region15: #{rq_decoder_forward.1} parent=1 // pred_check_branch
      %20 = sbr.rel (0) target = $region17
    $region16: #{rq_decoder_forward.1} parent=1 // pred_region
      _
    $region17: #{rq_decoder_forward.1} parent=1 // pred_fallthru
      _
    // Predicated region
    $region18: #{rq_decoder_forward.1} parent=1 // pred_check
      _
    $region19: #{rq_decoder_forward.1} parent=1 // pred_check_branch
      %22 = sbr.rel (0) target = $region21
    $region20: #{rq_decoder_forward.1} parent=1 // pred_region
      _
    $region21: #{rq_decoder_forward.1} parent=1 // pred_fallthru
      _
    // Predicated region
    $region22: #{rq_decoder_forward.1} parent=1 // pred_check
      _
    $region23: #{rq_decoder_forward.1} parent=1 // pred_check_branch
      %24 = sbr.rel (0) target = $region25
    $region24: #{rq_decoder_forward.1} parent=1 // pred_region
      _
    $region25: #{rq_decoder_forward.1} parent=1 // pred_fallthru
      _
    // Predicated region
    $region26: #{rq_decoder_forward.1} parent=1 // pred_check
      _
    $region27: #{rq_decoder_forward.1} parent=1 // pred_check_branch
      %26 = sbr.rel (0) target = $region29
    $region28: #{rq_decoder_forward.1} parent=1 // pred_region
      _
    $region29: #{rq_decoder_forward.1} parent=1 // pred_fallthru
      _
    %v27 = vld [vmem:[%s0] sm:$0xff]
    %v28 = vld [vmem:[%s1] sm:$0xff]
    %v29 = vld [vmem:[%s1 + $0x8] sm:$0xff]
    %v30 = vld [vmem:[%s1 + $0x10] sm:$0xff]
    %v31 = vld [vmem:[%s1 + $0x18] sm:$0xff]
    %v32 = vld [vmem:[%s2] sm:$0x1]
    %v34 = vlaneseq
    %v35 = vshrl.u32 %v34, 7
    %v36 = vsub.s32 0, %v35
    %v37 = vrot.slane %v32, %v36
    %vm39 = vcmask 261120
    %v41 = vsel %vm39, %v27, 0
    %43 = vmatprep.subr.mxu0 0.0
    %44 = vmatpush1.msra.mxu0 %v28
    %45 = vmatprep.subr.mxu0 0.0
    %46 = vmatpush1.msra.mxu0 %v29
    %47 = vmatprep.subr.mxu0 0.0
    %48 = vmatpush1.msra.mxu0 %v30
    %49 = vmatprep.subr.mxu0 0.0
    %50 = vmatpush1.msra.mxu0 %v31
    %51 = vmatprep.subr.mxu0 0.0
    %52 = vmatpush1.msra.mxu0 0.0
    %53 = vmatprep.subr.mxu0 0.0
    %54 = vmatpush1.msra.mxu0 0.0
    %55 = vmatprep.subr.mxu0 0.0
    %56 = vmatpush1.msra.mxu0 0.0
    %57 = vmatprep.subr.mxu0 0.0
    %58 = vmatpush1.msra.mxu0 0.0
    %59 = vmatprep.subr.mxu0 0.0
    %60 = vmatpush1.msra.mxu0 0.0
    %61 = vmatprep.subr.mxu0 0.0
    %62 = vmatpush1.msra.mxu0 0.0
    %63 = vmatprep.subr.mxu0 0.0
    %64 = vmatpush1.msra.mxu0 0.0
    %65 = vmatprep.subr.mxu0 0.0
    %66 = vmatpush1.msra.mxu0 0.0
    %67 = vmatprep.subr.mxu0 0.0
    %68 = vmatpush1.msra.mxu0 0.0
    %69 = vmatprep.subr.mxu0 0.0
    %70 = vmatpush1.msra.mxu0 0.0
    %71 = vmatprep.subr.mxu0 0.0
    %72 = vmatpush1.msra.mxu0 0.0
    %73 = vmatprep.subr.mxu0 0.0
    %74 = vmatpush1.msra.mxu0 0.0
    %75 = vmatprep.subr.mxu0 0.0
    %76 = vmatpush1.msra.mxu0 0.0
    %77 = vmatprep.subr.mxu0 0.0
    %78 = vmatpush1.msra.mxu0 0.0
    %79 = vmatprep.subr.mxu0 0.0
    %80 = vmatpush1.msra.mxu0 0.0
    %81 = vmatprep.subr.mxu0 0.0
    %82 = vmatpush1.msra.mxu0 0.0
    %83 = vmatprep.subr.mxu0 0.0
    %84 = vmatpush1.msra.mxu0 0.0
    %85 = vmatprep.subr.mxu0 0.0
    %86 = vmatpush1.msra.mxu0 0.0
    %87 = vmatprep.subr.mxu0 0.0
    %88 = vmatpush1.msra.mxu0 0.0
    %89 = vmatprep.subr.mxu0 0.0
    %90 = vmatpush1.msra.mxu0 0.0
    %91 = vmatprep.subr.mxu0 0.0
    %92 = vmatpush1.msra.mxu0 0.0
    %93 = vmatprep.subr.mxu0 0.0
    %94 = vmatpush1.msra.mxu0 0.0
    %95 = vmatprep.subr.mxu0 0.0
    %96 = vmatpush1.msra.mxu0 0.0
    %97 = vmatprep.subr.mxu0 0.0
    %98 = vmatpush1.msra.mxu0 0.0
    %99 = vmatprep.subr.mxu0 0.0
    %100 = vmatpush1.msra.mxu0 0.0
    %101 = vmatprep.subr.mxu0 0.0
    %102 = vmatpush1.msra.mxu0 0.0
    %103 = vmatprep.subr.mxu0 0.0
    %104 = vmatpush1.msra.mxu0 0.0
    %105 = vmatprep.subr.mxu0 0.0
    %106 = vmatpush1.msra.mxu0 0.0
    %107 = vmatprep.mubr.f32.mxu0 0.0
    %108 = vmatmul.mubr.f32.gmra.mrb[0].mxu0 %v41
    %v109 = vpop.f32.mrb[0].mxu0
    %v110 = vadd.f32 %v37, %v109
    %v111 = vpop.f32.mrb[0].mxu0
    %112 = vdwg.mxu0
    %v113 = vmax.f32 %v110, 0.0
    %v114 = vld [vmem:[%s3] sm:$0xff]
    %v115 = vld [vmem:[%s3 + $0x8] sm:$0xff]
    %v116 = vld [vmem:[%s3 + $0x10] sm:$0xff]
    %v117 = vld [vmem:[%s3 + $0x18] sm:$0xff]
    %v118 = vld [vmem:[%s3 + $0x20] sm:$0xff]
    %v119 = vld [vmem:[%s3 + $0x28] sm:$0xff]
    %v120 = vld [vmem:[%s3 + $0x30] sm:$0xff]
    %v121 = vld [vmem:[%s3 + $0x38] sm:$0xff]
    %v122 = vld [vmem:[%s4] sm:$0x1]
    %v124 = vlaneseq
    %v125 = vshrl.u32 %v124, 7
    %v126 = vsub.s32 0, %v125
    %v127 = vrot.slane %v122, %v126
    %vm129 = vcmask 523264
    %v131 = vsel %vm129, %v113, 0
    %133 = vmatprep.subr.mxu0 0.0
    %134 = vmatpush1.msra.mxu0 %v114
    %135 = vmatprep.subr.mxu0 0.0
    %136 = vmatpush1.msra.mxu0 %v115
    %137 = vmatprep.subr.mxu0 0.0
    %138 = vmatpush1.msra.mxu0 %v116
    %139 = vmatprep.subr.mxu0 0.0
    %140 = vmatpush1.msra.mxu0 %v117
    %141 = vmatprep.subr.mxu0 0.0
    %142 = vmatpush1.msra.mxu0 %v118
    %143 = vmatprep.subr.mxu0 0.0
    %144 = vmatpush1.msra.mxu0 %v119
    %145 = vmatprep.subr.mxu0 0.0
    %146 = vmatpush1.msra.mxu0 %v120
    %147 = vmatprep.subr.mxu0 0.0
    %148 = vmatpush1.msra.mxu0 %v121
    %149 = vmatprep.subr.mxu0 0.0
    %150 = vmatpush1.msra.mxu0 0.0
    %151 = vmatprep.subr.mxu0 0.0
    %152 = vmatpush1.msra.mxu0 0.0
    %153 = vmatprep.subr.mxu0 0.0
    %154 = vmatpush1.msra.mxu0 0.0
    %155 = vmatprep.subr.mxu0 0.0
    %156 = vmatpush1.msra.mxu0 0.0
    %157 = vmatprep.subr.mxu0 0.0
    %158 = vmatpush1.msra.mxu0 0.0
    %159 = vmatprep.subr.mxu0 0.0
    %160 = vmatpush1.msra.mxu0 0.0
    %161 = vmatprep.subr.mxu0 0.0
    %162 = vmatpush1.msra.mxu0 0.0
    %163 = vmatprep.subr.mxu0 0.0
    %164 = vmatpush1.msra.mxu0 0.0
    %165 = vmatprep.subr.mxu0 0.0
    %166 = vmatpush1.msra.mxu0 0.0
    %167 = vmatprep.subr.mxu0 0.0
    %168 = vmatpush1.msra.mxu0 0.0
    %169 = vmatprep.subr.mxu0 0.0
    %170 = vmatpush1.msra.mxu0 0.0
    %171 = vmatprep.subr.mxu0 0.0
    %172 = vmatpush1.msra.mxu0 0.0
    %173 = vmatprep.subr.mxu0 0.0
    %174 = vmatpush1.msra.mxu0 0.0
    %175 = vmatprep.subr.mxu0 0.0
    %176 = vmatpush1.msra.mxu0 0.0
    %177 = vmatprep.subr.mxu0 0.0
    %178 = vmatpush1.msra.mxu0 0.0
    %179 = vmatprep.subr.mxu0 0.0
    %180 = vmatpush1.msra.mxu0 0.0
    %181 = vmatprep.subr.mxu0 0.0
    %182 = vmatpush1.msra.mxu0 0.0
    %183 = vmatprep.subr.mxu0 0.0
    %184 = vmatpush1.msra.mxu0 0.0
    %185 = vmatprep.subr.mxu0 0.0
    %186 = vmatpush1.msra.mxu0 0.0
    %187 = vmatprep.subr.mxu0 0.0
    %188 = vmatpush1.msra.mxu0 0.0
    %189 = vmatprep.subr.mxu0 0.0
    %190 = vmatpush1.msra.mxu0 0.0
    %191 = vmatprep.subr.mxu0 0.0
    %192 = vmatpush1.msra.mxu0 0.0
    %193 = vmatprep.subr.mxu0 0.0
    %194 = vmatpush1.msra.mxu0 0.0
    %195 = vmatprep.subr.mxu0 0.0
    %196 = vmatpush1.msra.mxu0 0.0
    %197 = vmatprep.mubr.f32.mxu0 0.0
    %198 = vmatmul.mubr.f32.gmra.mrb[0].mxu0 %v131
    %v199 = vpop.f32.mrb[0].mxu0
    %v200 = vadd.f32 %v127, %v199
    %v201 = vpop.f32.mrb[0].mxu0
    %202 = vdwg.mxu0
    %v203 = vmax.f32 %v200, 0.0
    %v204 = vld [vmem:[%s5] sm:$0xff]
    %v205 = vld [vmem:[%s5 + $0x8] sm:$0xff]
    %v206 = vld [vmem:[%s5 + $0x10] sm:$0xff]
    %v207 = vld [vmem:[%s5 + $0x18] sm:$0xff]
    %v208 = vld [vmem:[%s5 + $0x20] sm:$0xff]
    %v209 = vld [vmem:[%s5 + $0x28] sm:$0xff]
    %v210 = vld [vmem:[%s6] sm:$0x1]
    %v212 = vlaneseq
    %v213 = vshrl.u32 %v212, 7
    %v214 = vsub.s32 0, %v213
    %v215 = vrot.slane %v210, %v214
    %vm217 = vcmask 392192
    %v219 = vsel %vm217, %v203, 0
    %221 = vmatprep.subr.mxu0 0.0
    %222 = vmatpush1.msra.mxu0 %v204
    %223 = vmatprep.subr.mxu0 0.0
    %224 = vmatpush1.msra.mxu0 %v205
    %225 = vmatprep.subr.mxu0 0.0
    %226 = vmatpush1.msra.mxu0 %v206
    %227 = vmatprep.subr.mxu0 0.0
    %228 = vmatpush1.msra.mxu0 %v207
    %229 = vmatprep.subr.mxu0 0.0
    %230 = vmatpush1.msra.mxu0 %v208
    %231 = vmatprep.subr.mxu0 0.0
    %232 = vmatpush1.msra.mxu0 %v209
    %233 = vmatprep.subr.mxu0 0.0
    %234 = vmatpush1.msra.mxu0 0.0
    %235 = vmatprep.subr.mxu0 0.0
    %236 = vmatpush1.msra.mxu0 0.0
    %237 = vmatprep.subr.mxu0 0.0
    %238 = vmatpush1.msra.mxu0 0.0
    %239 = vmatprep.subr.mxu0 0.0
    %240 = vmatpush1.msra.mxu0 0.0
    %241 = vmatprep.subr.mxu0 0.0
    %242 = vmatpush1.msra.mxu0 0.0
    %243 = vmatprep.subr.mxu0 0.0
    %244 = vmatpush1.msra.mxu0 0.0
    %245 = vmatprep.subr.mxu0 0.0
    %246 = vmatpush1.msra.mxu0 0.0
    %247 = vmatprep.subr.mxu0 0.0
    %248 = vmatpush1.msra.mxu0 0.0
    %249 = vmatprep.subr.mxu0 0.0
    %250 = vmatpush1.msra.mxu0 0.0
    %251 = vmatprep.subr.mxu0 0.0
    %252 = vmatpush1.msra.mxu0 0.0
    %253 = vmatprep.subr.mxu0 0.0
    %254 = vmatpush1.msra.mxu0 0.0
    %255 = vmatprep.subr.mxu0 0.0
    %256 = vmatpush1.msra.mxu0 0.0
    %257 = vmatprep.subr.mxu0 0.0
    %258 = vmatpush1.msra.mxu0 0.0
    %259 = vmatprep.subr.mxu0 0.0
    %260 = vmatpush1.msra.mxu0 0.0
    %261 = vmatprep.subr.mxu0 0.0
    %262 = vmatpush1.msra.mxu0 0.0
    %263 = vmatprep.subr.mxu0 0.0
    %264 = vmatpush1.msra.mxu0 0.0
    %265 = vmatprep.subr.mxu0 0.0
    %266 = vmatpush1.msra.mxu0 0.0
    %267 = vmatprep.subr.mxu0 0.0
    %268 = vmatpush1.msra.mxu0 0.0
    %269 = vmatprep.subr.mxu0 0.0
    %270 = vmatpush1.msra.mxu0 0.0
    %271 = vmatprep.subr.mxu0 0.0
    %272 = vmatpush1.msra.mxu0 0.0
    %273 = vmatprep.subr.mxu0 0.0
    %274 = vmatpush1.msra.mxu0 0.0
    %275 = vmatprep.subr.mxu0 0.0
    %276 = vmatpush1.msra.mxu0 0.0
    %277 = vmatprep.subr.mxu0 0.0
    %278 = vmatpush1.msra.mxu0 0.0
    %279 = vmatprep.subr.mxu0 0.0
    %280 = vmatpush1.msra.mxu0 0.0
    %281 = vmatprep.subr.mxu0 0.0
    %282 = vmatpush1.msra.mxu0 0.0
    %283 = vmatprep.subr.mxu0 0.0
    %284 = vmatpush1.msra.mxu0 0.0
    %285 = vmatprep.mubr.f32.mxu0 0.0
    %286 = vmatmul.mubr.f32.gmra.mrb[0].mxu0 %v219
    %v287 = vpop.f32.mrb[0].mxu0
    %v288 = vadd.f32 %v215, %v287
    %v289 = vpop.f32.mrb[0].mxu0
    %290 = vdwg.mxu0
    %v291 = vmax.f32 %v288, 0.0
    %292 = vst [vmem:[#allocation2] sm:$0xff] %v291
    // Predicated region
    $region30: #{rq_decoder_forward.1} parent=1 // pred_check
      _
    $region31: #{rq_decoder_forward.1} parent=1 // pred_check_branch
      %294 = sbr.rel (0) target = $region33
    $region32: #{rq_decoder_forward.1} parent=1 // pred_region
      %s296 = ssub.s32 128, 128
      %297 = vsyncadd [#allocation3], %s296
      %s299 = sshll.u32 [#allocation2], 4
      %s300 = int_to_ptr.vmem [resolvable:$true] %s299
      %302 = dma.vmem_to_hbm [thread:$0]  %s300, 128, %s7, [#allocation3]
    $region33: #{rq_decoder_forward.1} parent=1 // pred_fallthru
      _
    // Predicated region
    $region34: #{rq_decoder_forward.1} parent=1 // pred_check
      _
    $region35: #{rq_decoder_forward.1} parent=1 // pred_check_branch
      %304 = sbr.rel (0) target = $region37
    $region36: #{rq_decoder_forward.1} parent=1 // pred_region
      %305 = dma.done [#allocation3], 128
    $region37: #{rq_decoder_forward.1} parent=1 // pred_fallthru
      _
    %306 = vsyncpa [#allocation3], 1

</llo_original>
